<compile_context>
chip_gen: v7x
topology: tpu7x:2x2x1
jax: 0.10.0
libtpu: 0.0.40
codegen_flags: <defaults>
</compile_context>

<pallas_src>
import numpy as np
import jax
import jax.numpy as jnp
from jax import lax
from jax.experimental import pallas as pl
from jax.experimental.pallas import tpu as pltpu


# ---------------- deterministic "parameter" (binomial 5x5 Gaussian) ----------
def _gauss_kernel_np():
    k = np.array([1.0, 4.0, 6.0, 4.0, 1.0], dtype=np.float32)
    k = np.outer(k, k)
    k /= k.sum()
    return k  # (5,5), matches GaussianPyramid._create_kernel


_W2 = _gauss_kernel_np()


# ------------------------------- Pallas kernel --------------------------------
def _downsample_kernel(x00_ref, x01_ref, x10_ref, x11_ref,
                       h00a_ref, h00b_ref, h01a_ref, h01b_ref,
                       h10a_ref, h11a_ref, o_ref):
    # Main phase blocks: (T, PW2, ncb)   x_pq[i, j, c] = xpad[2i+p, 2j+q, c]
    # Halo blocks      : (1, PW2, ncb)   (phase rows t*T+T and t*T+T+1)
    # Output block     : (T, OW, ncb)    lane axis = NC tile (lane-dense store)
    T = x00_ref.shape[0]
    OW = o_ref.shape[1]
    w0, w1, w2 = 1.0 / 16.0, 4.0 / 16.0, 6.0 / 16.0
    f32 = jnp.float32

    def hblur(e, o):
        # Horizontal 5-tap binomial blur at stride 2 from the two column-phase
        # planes; symmetric taps folded (add before multiply).
        return (w2 * e[:, 1:OW + 1]
                + w0 * (e[:, 0:OW] + e[:, 2:OW + 2])
                + w1 * (o[:, 0:OW] + o[:, 1:OW + 1]))

    t0 = hblur(x00_ref[...].astype(f32), x01_ref[...].astype(f32))   # even rows [tT, tT+T)
    t1 = hblur(x10_ref[...].astype(f32), x11_ref[...].astype(f32))   # odd  rows [tT, tT+T)
    t0a = hblur(h00a_ref[...].astype(f32), h01a_ref[...].astype(f32))  # even row tT+T
    t0b = hblur(h00b_ref[...].astype(f32), h01b_ref[...].astype(f32))  # even row tT+T+1
    t1a = hblur(h10a_ref[...].astype(f32), h11a_ref[...].astype(f32))  # odd  row tT+T

    # Vertical 5-tap blur at stride 2 (shifts along the leading axis: cheap).
    # out[i] = w0*(t0[i] + t0[i+2]) + w2*t0[i+1] + w1*(t1[i] + t1[i+1])
    Tb = T - 2
    if T > 2:   # body rows: everything except the last two (no halo needed)
        body = (w2 * t0[1:Tb + 1]
                + w0 * (t0[0:Tb] + t0[2:Tb + 2])
                + w1 * (t1[0:Tb] + t1[1:Tb + 1]))
        o_ref[0:Tb] = body.astype(o_ref.dtype)

    # Last two output rows of the tile use the 1-row halo operands.
    r0 = (w2 * t0[Tb + 1:T]
          + w0 * (t0[Tb:Tb + 1] + t0a)
          + w1 * (t1[Tb:Tb + 1] + t1[Tb + 1:T]))
    r1 = (w2 * t0a
          + w0 * (t0[Tb + 1:T] + t0b)
          + w1 * (t1[Tb + 1:T] + t1a))
    o_ref[Tb:Tb + 1] = r0.astype(o_ref.dtype)
    o_ref[Tb + 1:T] = r1.astype(o_ref.dtype)


# ----------------------------- host-side helpers -------------------------------
def _vmem_limit_bytes():
    """Generation-aware scoped-VMEM request (v7x has 64 MiB, v5e/v6e 128 MiB)."""
    try:
        cap = int(getattr(pltpu.get_tpu_info(), "vmem_capacity_bytes", 0) or 0)
    except Exception:  # pragma: no cover - defensive (interpret mode etc.)
        cap = 0
    if cap <= 0:
        cap = 64 * 1024 * 1024
    return min(max(cap // 2, 32 * 1024 * 1024), 100 * 1024 * 1024)


def _pick_row_tile(OH, PW2, OW, ncb, budget_bytes, max_rows=None):
    """Largest divisor of OH whose double-buffered blocks + temporaries fit."""
    # Conservative f32-based estimate per output row: double-buffered inputs,
    # in-kernel f32 copies, hblur temporaries and the output block.
    per_row = (12 * PW2 + 6 * OW) * ncb * 4
    cap = max(2, int(budget_bytes // max(per_row, 1)))
    if max_rows is not None:
        cap = max(2, min(cap, int(max_rows)))
    cap = min(cap, OH)
    best = None
    for d in range(2, cap + 1):
        if OH % d == 0:
            best = d
    if best is None:
        for d in range(2, OH + 1):       # smallest divisor >= 2 (correctness first)
            if OH % d == 0:
                best = d
                break
    return best if best is not None else OH


def _downsample_hwc(x, *, max_rows_per_tile=None):
    """One pyramid level on an (H, W, NC) plane stack: reflect-pad(2),
    5x5 depthwise binomial blur, stride 2. Returns (H//2, W//2, NC)."""
    H, W, NC = x.shape
    assert H % 2 == 0 and W % 2 == 0, "even spatial dims required per level"
    assert H > 2 and W > 2, "reflection pad of 2 needs spatial dims > 2"
    OH, OW = H // 2, W // 2
    PH2, PW2 = OH + 2, OW + 2
    itemsize = jnp.dtype(x.dtype).itemsize

    # Lane tiling over NC (lane axis). Small NC -> single (narrow) block.
    if NC <= 128:
        ncb, pad_c = NC, 0
    else:
        ncb, pad_c = 128, (-NC) % 128
    if pad_c:
        x = jnp.pad(x, ((0, 0), (0, 0), (0, pad_c)))
    ncp = NC + pad_c
    num_c = ncp // ncb

    # Host pass: reflect-pad + space-to-depth phase split (single fused pass).
    # TODO(synk): move this into the kernel (strided in-kernel decimation of the
    #             raw plane) to drop ~one full HBM round trip per level.
    xp = jnp.pad(x, ((2, 2), (2, 2), (0, 0)), mode="reflect")   # (H+4, W+4, ncp)
    x00 = xp[0::2, 0::2]
    x01 = xp[0::2, 1::2]
    x10 = xp[1::2, 0::2]
    x11 = xp[1::2, 1::2]                                        # each (PH2, PW2, ncp)

    vmem_limit = _vmem_limit_bytes()
    T = _pick_row_tile(OH, PW2, OW, ncb, (vmem_limit * 2) // 3, max_rows_per_tile)
    num_t = OH // T
    grid = (num_c, num_t)

    main_spec = pl.BlockSpec((T, PW2, ncb), lambda c, t: (t, 0, c))

    def halo_spec(off):
        # 1-row halo block: with block size 1 along the row axis the block
        # index is the phase-row index itself (t*T + T + off), always in-bounds
        # because the padded phases have OH+2 rows.
        return pl.BlockSpec((1, PW2, ncb),
                            lambda c, t, _o=off: (t * T + T + _o, 0, c))

    in_specs = [main_spec, main_spec, main_spec, main_spec,
                halo_spec(0), halo_spec(1),     # x00 rows tT+T, tT+T+1
                halo_spec(0), halo_spec(1),     # x01 rows tT+T, tT+T+1
                halo_spec(0),                   # x10 row  tT+T
                halo_spec(0)]                   # x11 row  tT+T
    out_spec = pl.BlockSpec((T, OW, ncb), lambda c, t: (t, 0, c))

    cost = pl.CostEstimate(
        flops=int(28 * OH * OW * ncp),
        transcendentals=0,
        bytes_accessed=int((4 * T + 6) * PW2 * ncb * num_t * num_c * itemsize
                           + OH * OW * ncp * itemsize))

    out = pl.pallas_call(
        _downsample_kernel,
        out_shape=jax.ShapeDtypeStruct((OH, OW, ncp), x.dtype),
        grid=grid,
        in_specs=in_specs,
        out_specs=out_spec,
        compiler_params=pltpu.CompilerParams(
            dimension_semantics=("parallel", "parallel"),
            vmem_limit_bytes=vmem_limit),
        cost_estimate=cost,
    )(x00, x01, x10, x11,
      x00, x00, x01, x01, x10, x11)

    return out[:, :, :NC] if pad_c else out


def gaussian_pyramid(x, nlevels, *, max_rows_per_tile=None):
    """Equivalent of GaussianPyramid(nlevels).forward(x). Returns a list (NCHW)."""
    N, C, H, W = x.shape
    NC = N * C
    levels = [x]
    # One layout pass: NCHW -> (H, W, NC); the working layout is kept across
    # levels, only the user-facing NCHW copies are transposed out per level.
    cur = jnp.transpose(x.reshape(NC, H, W), (1, 2, 0))
    for _ in range(nlevels):
        cur = _downsample_hwc(cur, max_rows_per_tile=max_rows_per_tile)
        h, w = cur.shape[0], cur.shape[1]
        levels.append(jnp.transpose(cur, (2, 0, 1)).reshape(N, C, h, w))
    return levels


# ----------------------------- pure-JAX reference ------------------------------
def _ref_downsample(x):
    N, C, H, W = x.shape
    xp = jnp.pad(x, ((0, 0), (0, 0), (2, 2), (2, 2)), mode="reflect")
    w = jnp.asarray(_W2)[None, None]            # (1,1,5,5)
    w = jnp.tile(w, (C, 1, 1, 1))               # (C,1,5,5) depthwise
    return lax.conv_general_dilated(
        xp, w, window_strides=(2, 2), padding="VALID",
        dimension_numbers=("NCHW", "OIHW", "NCHW"),
        feature_group_count=C)


def _ref_pyramid(x, nlevels):
    levels = [x]
    for _ in range(nlevels):
        x = _ref_downsample(x)
        levels.append(x)
    return levels


# ----------------------------------- main --------------------------------------
if __name__ == "__main__":
    key = jax.random.PRNGKey(0)
    N, C, H, W = 2, 4, 16, 16
    nlevels = 2
    x = jax.random.normal(key, (N, C, H, W), dtype=jnp.float32)

    ref = _ref_pyramid(x, nlevels)

    # Default tiling (single row-tile at these small shapes) and a forced small
    # row tile (exercises the multi-tile halo path and the T==2 tail-only path).
    for tile_override in (None, 2):
        levels = gaussian_pyramid(x, nlevels, max_rows_per_tile=tile_override)
        levels = [jax.block_until_ready(l) for l in levels]
        assert len(levels) == nlevels + 1
        for got, want in zip(levels, ref):
            assert got.shape == want.shape, (got.shape, want.shape)
            np.testing.assert_allclose(np.asarray(got), np.asarray(want),
                                       rtol=1e-5, atol=1e-5)

    print("KERNEL_OK")
</pallas_src>

<mosaic_0001>
module attributes {stable_mosaic.version = 11 : i64} {
  func.func @_downsample_kernel(%arg0: i32, %arg1: i32, %arg2: memref<8x10x8xf32, #tpu.memory_space<vmem>>, %arg3: memref<8x10x8xf32, #tpu.memory_space<vmem>>, %arg4: memref<8x10x8xf32, #tpu.memory_space<vmem>>, %arg5: memref<8x10x8xf32, #tpu.memory_space<vmem>>, %arg6: memref<1x10x8xf32, #tpu.memory_space<vmem>>, %arg7: memref<1x10x8xf32, #tpu.memory_space<vmem>>, %arg8: memref<1x10x8xf32, #tpu.memory_space<vmem>>, %arg9: memref<1x10x8xf32, #tpu.memory_space<vmem>>, %arg10: memref<1x10x8xf32, #tpu.memory_space<vmem>>, %arg11: memref<1x10x8xf32, #tpu.memory_space<vmem>>, %arg12: memref<8x8x8xf32, #tpu.memory_space<vmem>>) attributes {dimension_semantics = [#tpu.dimension_semantics<parallel>, #tpu.dimension_semantics<parallel>], iteration_bounds = array<i64: 1, 1>, scalar_prefetch = 0 : i64, scratch_operands = 0 : i64, tpu.core_type = #tpu.core_type<tc>, window_params = [{transform_indices = @transform_0, window_bounds = array<i64: 8, 10, 8>}, {transform_indices = @transform_1, window_bounds = array<i64: 8, 10, 8>}, {transform_indices = @transform_2, window_bounds = array<i64: 8, 10, 8>}, {transform_indices = @transform_3, window_bounds = array<i64: 8, 10, 8>}, {transform_indices = @transform_4, window_bounds = array<i64: 1, 10, 8>}, {transform_indices = @transform_5, window_bounds = array<i64: 1, 10, 8>}, {transform_indices = @transform_6, window_bounds = array<i64: 1, 10, 8>}, {transform_indices = @transform_7, window_bounds = array<i64: 1, 10, 8>}, {transform_indices = @transform_8, window_bounds = array<i64: 1, 10, 8>}, {transform_indices = @transform_9, window_bounds = array<i64: 1, 10, 8>}, {transform_indices = @transform_10, window_bounds = array<i64: 8, 8, 8>}]} {
    %c0 = arith.constant 0 : index
    %c0_0 = arith.constant 0 : index
    %c0_1 = arith.constant 0 : index
    %0 = vector.load %arg2[%c0, %c0_0, %c0_1] : memref<8x10x8xf32, #tpu.memory_space<vmem>>, vector<8x10x8xf32>
    %c0_2 = arith.constant 0 : index
    %c0_3 = arith.constant 0 : index
    %c0_4 = arith.constant 0 : index
    %1 = vector.load %arg3[%c0_2, %c0_3, %c0_4] : memref<8x10x8xf32, #tpu.memory_space<vmem>>, vector<8x10x8xf32>
    %2 = vector.extract_strided_slice %0 {offsets = [0, 1, 0], sizes = [8, 8, 8], strides = [1, 1, 1]} : vector<8x10x8xf32> to vector<8x8x8xf32>
    %cst = arith.constant 3.750000e-01 : f32
    %3 = vector.broadcast %cst : f32 to vector<8x8x8xf32>
    %4 = arith.mulf %3, %2 : vector<8x8x8xf32>
    %5 = vector.extract_strided_slice %0 {offsets = [0, 0, 0], sizes = [8, 8, 8], strides = [1, 1, 1]} : vector<8x10x8xf32> to vector<8x8x8xf32>
    %6 = vector.extract_strided_slice %0 {offsets = [0, 2, 0], sizes = [8, 8, 8], strides = [1, 1, 1]} : vector<8x10x8xf32> to vector<8x8x8xf32>
    %7 = arith.addf %5, %6 : vector<8x8x8xf32>
    %cst_5 = arith.constant 6.250000e-02 : f32
    %8 = vector.broadcast %cst_5 : f32 to vector<8x8x8xf32>
    %9 = arith.mulf %8, %7 : vector<8x8x8xf32>
    %10 = arith.addf %4, %9 : vector<8x8x8xf32>
    %11 = vector.extract_strided_slice %1 {offsets = [0, 0, 0], sizes = [8, 8, 8], strides = [1, 1, 1]} : vector<8x10x8xf32> to vector<8x8x8xf32>
    %12 = vector.extract_strided_slice %1 {offsets = [0, 1, 0], sizes = [8, 8, 8], strides = [1, 1, 1]} : vector<8x10x8xf32> to vector<8x8x8xf32>
    %13 = arith.addf %11, %12 : vector<8x8x8xf32>
    %cst_6 = arith.constant 2.500000e-01 : f32
    %14 = vector.broadcast %cst_6 : f32 to vector<8x8x8xf32>
    %15 = arith.mulf %14, %13 : vector<8x8x8xf32>
    %16 = arith.addf %10, %15 : vector<8x8x8xf32>
    %c0_7 = arith.constant 0 : index
    %c0_8 = arith.constant 0 : index
    %c0_9 = arith.constant 0 : index
    %17 = vector.load %arg4[%c0_7, %c0_8, %c0_9] : memref<8x10x8xf32, #tpu.memory_space<vmem>>, vector<8x10x8xf32>
    %c0_10 = arith.constant 0 : index
    %c0_11 = arith.constant 0 : index
    %c0_12 = arith.constant 0 : index
    %18 = vector.load %arg5[%c0_10, %c0_11, %c0_12] : memref<8x10x8xf32, #tpu.memory_space<vmem>>, vector<8x10x8xf32>
    %19 = vector.extract_strided_slice %17 {offsets = [0, 1, 0], sizes = [8, 8, 8], strides = [1, 1, 1]} : vector<8x10x8xf32> to vector<8x8x8xf32>
    %cst_13 = arith.constant 3.750000e-01 : f32
    %20 = vector.broadcast %cst_13 : f32 to vector<8x8x8xf32>
    %21 = arith.mulf %20, %19 : vector<8x8x8xf32>
    %22 = vector.extract_strided_slice %17 {offsets = [0, 0, 0], sizes = [8, 8, 8], strides = [1, 1, 1]} : vector<8x10x8xf32> to vector<8x8x8xf32>
    %23 = vector.extract_strided_slice %17 {offsets = [0, 2, 0], sizes = [8, 8, 8], strides = [1, 1, 1]} : vector<8x10x8xf32> to vector<8x8x8xf32>
    %24 = arith.addf %22, %23 : vector<8x8x8xf32>
    %cst_14 = arith.constant 6.250000e-02 : f32
    %25 = vector.broadcast %cst_14 : f32 to vector<8x8x8xf32>
    %26 = arith.mulf %25, %24 : vector<8x8x8xf32>
    %27 = arith.addf %21, %26 : vector<8x8x8xf32>
    %28 = vector.extract_strided_slice %18 {offsets = [0, 0, 0], sizes = [8, 8, 8], strides = [1, 1, 1]} : vector<8x10x8xf32> to vector<8x8x8xf32>
    %29 = vector.extract_strided_slice %18 {offsets = [0, 1, 0], sizes = [8, 8, 8], strides = [1, 1, 1]} : vector<8x10x8xf32> to vector<8x8x8xf32>
    %30 = arith.addf %28, %29 : vector<8x8x8xf32>
    %cst_15 = arith.constant 2.500000e-01 : f32
    %31 = vector.broadcast %cst_15 : f32 to vector<8x8x8xf32>
    %32 = arith.mulf %31, %30 : vector<8x8x8xf32>
    %33 = arith.addf %27, %32 : vector<8x8x8xf32>
    %c0_16 = arith.constant 0 : index
    %c0_17 = arith.constant 0 : index
    %c0_18 = arith.constant 0 : index
    %34 = vector.load %arg6[%c0_16, %c0_17, %c0_18] : memref<1x10x8xf32, #tpu.memory_space<vmem>>, vector<1x10x8xf32>
    %c0_19 = arith.constant 0 : index
    %c0_20 = arith.constant 0 : index
    %c0_21 = arith.constant 0 : index
    %35 = vector.load %arg8[%c0_19, %c0_20, %c0_21] : memref<1x10x8xf32, #tpu.memory_space<vmem>>, vector<1x10x8xf32>
    %36 = vector.extract_strided_slice %34 {offsets = [0, 1, 0], sizes = [1, 8, 8], strides = [1, 1, 1]} : vector<1x10x8xf32> to vector<1x8x8xf32>
    %cst_22 = arith.constant 3.750000e-01 : f32
    %37 = vector.broadcast %cst_22 : f32 to vector<1x8x8xf32>
    %38 = arith.mulf %37, %36 : vector<1x8x8xf32>
    %39 = vector.extract_strided_slice %34 {offsets = [0, 0, 0], sizes = [1, 8, 8], strides = [1, 1, 1]} : vector<1x10x8xf32> to vector<1x8x8xf32>
    %40 = vector.extract_strided_slice %34 {offsets = [0, 2, 0], sizes = [1, 8, 8], strides = [1, 1, 1]} : vector<1x10x8xf32> to vector<1x8x8xf32>
    %41 = arith.addf %39, %40 : vector<1x8x8xf32>
    %cst_23 = arith.constant 6.250000e-02 : f32
    %42 = vector.broadcast %cst_23 : f32 to vector<1x8x8xf32>
    %43 = arith.mulf %42, %41 : vector<1x8x8xf32>
    %44 = arith.addf %38, %43 : vector<1x8x8xf32>
    %45 = vector.extract_strided_slice %35 {offsets = [0, 0, 0], sizes = [1, 8, 8], strides = [1, 1, 1]} : vector<1x10x8xf32> to vector<1x8x8xf32>
    %46 = vector.extract_strided_slice %35 {offsets = [0, 1, 0], sizes = [1, 8, 8], strides = [1, 1, 1]} : vector<1x10x8xf32> to vector<1x8x8xf32>
    %47 = arith.addf %45, %46 : vector<1x8x8xf32>
    %cst_24 = arith.constant 2.500000e-01 : f32
    %48 = vector.broadcast %cst_24 : f32 to vector<1x8x8xf32>
    %49 = arith.mulf %48, %47 : vector<1x8x8xf32>
    %50 = arith.addf %44, %49 : vector<1x8x8xf32>
    %c0_25 = arith.constant 0 : index
    %c0_26 = arith.constant 0 : index
    %c0_27 = arith.constant 0 : index
    %51 = vector.load %arg7[%c0_25, %c0_26, %c0_27] : memref<1x10x8xf32, #tpu.memory_space<vmem>>, vector<1x10x8xf32>
    %c0_28 = arith.constant 0 : index
    %c0_29 = arith.constant 0 : index
    %c0_30 = arith.constant 0 : index
    %52 = vector.load %arg9[%c0_28, %c0_29, %c0_30] : memref<1x10x8xf32, #tpu.memory_space<vmem>>, vector<1x10x8xf32>
    %53 = vector.extract_strided_slice %51 {offsets = [0, 1, 0], sizes = [1, 8, 8], strides = [1, 1, 1]} : vector<1x10x8xf32> to vector<1x8x8xf32>
    %cst_31 = arith.constant 3.750000e-01 : f32
    %54 = vector.broadcast %cst_31 : f32 to vector<1x8x8xf32>
    %55 = arith.mulf %54, %53 : vector<1x8x8xf32>
    %56 = vector.extract_strided_slice %51 {offsets = [0, 0, 0], sizes = [1, 8, 8], strides = [1, 1, 1]} : vector<1x10x8xf32> to vector<1x8x8xf32>
    %57 = vector.extract_strided_slice %51 {offsets = [0, 2, 0], sizes = [1, 8, 8], strides = [1, 1, 1]} : vector<1x10x8xf32> to vector<1x8x8xf32>
    %58 = arith.addf %56, %57 : vector<1x8x8xf32>
    %cst_32 = arith.constant 6.250000e-02 : f32
    %59 = vector.broadcast %cst_32 : f32 to vector<1x8x8xf32>
    %60 = arith.mulf %59, %58 : vector<1x8x8xf32>
    %61 = arith.addf %55, %60 : vector<1x8x8xf32>
    %62 = vector.extract_strided_slice %52 {offsets = [0, 0, 0], sizes = [1, 8, 8], strides = [1, 1, 1]} : vector<1x10x8xf32> to vector<1x8x8xf32>
    %63 = vector.extract_strided_slice %52 {offsets = [0, 1, 0], sizes = [1, 8, 8], strides = [1, 1, 1]} : vector<1x10x8xf32> to vector<1x8x8xf32>
    %64 = arith.addf %62, %63 : vector<1x8x8xf32>
    %cst_33 = arith.constant 2.500000e-01 : f32
    %65 = vector.broadcast %cst_33 : f32 to vector<1x8x8xf32>
    %66 = arith.mulf %65, %64 : vector<1x8x8xf32>
    %67 = arith.addf %61, %66 : vector<1x8x8xf32>
    %c0_34 = arith.constant 0 : index
    %c0_35 = arith.constant 0 : index
    %c0_36 = arith.constant 0 : index
    %68 = vector.load %arg10[%c0_34, %c0_35, %c0_36] : memref<1x10x8xf32, #tpu.memory_space<vmem>>, vector<1x10x8xf32>
    %c0_37 = arith.constant 0 : index
    %c0_38 = arith.constant 0 : index
    %c0_39 = arith.constant 0 : index
    %69 = vector.load %arg11[%c0_37, %c0_38, %c0_39] : memref<1x10x8xf32, #tpu.memory_space<vmem>>, vector<1x10x8xf32>
    %70 = vector.extract_strided_slice %68 {offsets = [0, 1, 0], sizes = [1, 8, 8], strides = [1, 1, 1]} : vector<1x10x8xf32> to vector<1x8x8xf32>
    %cst_40 = arith.constant 3.750000e-01 : f32
    %71 = vector.broadcast %cst_40 : f32 to vector<1x8x8xf32>
    %72 = arith.mulf %71, %70 : vector<1x8x8xf32>
    %73 = vector.extract_strided_slice %68 {offsets = [0, 0, 0], sizes = [1, 8, 8], strides = [1, 1, 1]} : vector<1x10x8xf32> to vector<1x8x8xf32>
    %74 = vector.extract_strided_slice %68 {offsets = [0, 2, 0], sizes = [1, 8, 8], strides = [1, 1, 1]} : vector<1x10x8xf32> to vector<1x8x8xf32>
    %75 = arith.addf %73, %74 : vector<1x8x8xf32>
    %cst_41 = arith.constant 6.250000e-02 : f32
    %76 = vector.broadcast %cst_41 : f32 to vector<1x8x8xf32>
    %77 = arith.mulf %76, %75 : vector<1x8x8xf32>
    %78 = arith.addf %72, %77 : vector<1x8x8xf32>
    %79 = vector.extract_strided_slice %69 {offsets = [0, 0, 0], sizes = [1, 8, 8], strides = [1, 1, 1]} : vector<1x10x8xf32> to vector<1x8x8xf32>
    %80 = vector.extract_strided_slice %69 {offsets = [0, 1, 0], sizes = [1, 8, 8], strides = [1, 1, 1]} : vector<1x10x8xf32> to vector<1x8x8xf32>
    %81 = arith.addf %79, %80 : vector<1x8x8xf32>
    %cst_42 = arith.constant 2.500000e-01 : f32
    %82 = vector.broadcast %cst_42 : f32 to vector<1x8x8xf32>
    %83 = arith.mulf %82, %81 : vector<1x8x8xf32>
    %84 = arith.addf %78, %83 : vector<1x8x8xf32>
    %85 = vector.extract_strided_slice %16 {offsets = [1, 0, 0], sizes = [6, 8, 8], strides = [1, 1, 1]} : vector<8x8x8xf32> to vector<6x8x8xf32>
    %cst_43 = arith.constant 3.750000e-01 : f32
    %86 = vector.broadcast %cst_43 : f32 to vector<6x8x8xf32>
    %87 = arith.mulf %86, %85 : vector<6x8x8xf32>
    %88 = vector.extract_strided_slice %16 {offsets = [0, 0, 0], sizes = [6, 8, 8], strides = [1, 1, 1]} : vector<8x8x8xf32> to vector<6x8x8xf32>
    %89 = vector.extract_strided_slice %16 {offsets = [2, 0, 0], sizes = [6, 8, 8], strides = [1, 1, 1]} : vector<8x8x8xf32> to vector<6x8x8xf32>
    %90 = arith.addf %88, %89 : vector<6x8x8xf32>
    %cst_44 = arith.constant 6.250000e-02 : f32
    %91 = vector.broadcast %cst_44 : f32 to vector<6x8x8xf32>
    %92 = arith.mulf %91, %90 : vector<6x8x8xf32>
    %93 = arith.addf %87, %92 : vector<6x8x8xf32>
    %94 = vector.extract_strided_slice %33 {offsets = [0, 0, 0], sizes = [6, 8, 8], strides = [1, 1, 1]} : vector<8x8x8xf32> to vector<6x8x8xf32>
    %95 = vector.extract_strided_slice %33 {offsets = [1, 0, 0], sizes = [6, 8, 8], strides = [1, 1, 1]} : vector<8x8x8xf32> to vector<6x8x8xf32>
    %96 = arith.addf %94, %95 : vector<6x8x8xf32>
    %cst_45 = arith.constant 2.500000e-01 : f32
    %97 = vector.broadcast %cst_45 : f32 to vector<6x8x8xf32>
    %98 = arith.mulf %97, %96 : vector<6x8x8xf32>
    %99 = arith.addf %93, %98 : vector<6x8x8xf32>
    %c0_46 = arith.constant 0 : index
    %c0_47 = arith.constant 0 : index
    %c0_48 = arith.constant 0 : index
    %100 = vector.load %arg12[%c0_46, %c0_47, %c0_48] : memref<8x8x8xf32, #tpu.memory_space<vmem>>, vector<6x8x8xf32>
    tpu.vector_store %arg12[%c0_46, %c0_47, %c0_48], %99 {strides = array<i32>} : memref<8x8x8xf32, #tpu.memory_space<vmem>>, vector<6x8x8xf32>,
    %101 = vector.extract_strided_slice %16 {offsets = [7, 0, 0], sizes = [1, 8, 8], strides = [1, 1, 1]} : vector<8x8x8xf32> to vector<1x8x8xf32>
    %cst_49 = arith.constant 3.750000e-01 : f32
    %102 = vector.broadcast %cst_49 : f32 to vector<1x8x8xf32>
    %103 = arith.mulf %102, %101 : vector<1x8x8xf32>
    %104 = vector.extract_strided_slice %16 {offsets = [6, 0, 0], sizes = [1, 8, 8], strides = [1, 1, 1]} : vector<8x8x8xf32> to vector<1x8x8xf32>
    %105 = arith.addf %104, %50 : vector<1x8x8xf32>
    %cst_50 = arith.constant 6.250000e-02 : f32
    %106 = vector.broadcast %cst_50 : f32 to vector<1x8x8xf32>
    %107 = arith.mulf %106, %105 : vector<1x8x8xf32>
    %108 = arith.addf %103, %107 : vector<1x8x8xf32>
    %109 = vector.extract_strided_slice %33 {offsets = [6, 0, 0], sizes = [1, 8, 8], strides = [1, 1, 1]} : vector<8x8x8xf32> to vector<1x8x8xf32>
    %110 = vector.extract_strided_slice %33 {offsets = [7, 0, 0], sizes = [1, 8, 8], strides = [1, 1, 1]} : vector<8x8x8xf32> to vector<1x8x8xf32>
    %111 = arith.addf %109, %110 : vector<1x8x8xf32>
    %cst_51 = arith.constant 2.500000e-01 : f32
    %112 = vector.broadcast %cst_51 : f32 to vector<1x8x8xf32>
    %113 = arith.mulf %112, %111 : vector<1x8x8xf32>
    %114 = arith.addf %108, %113 : vector<1x8x8xf32>
    %cst_52 = arith.constant 3.750000e-01 : f32
    %115 = vector.broadcast %cst_52 : f32 to vector<1x8x8xf32>
    %116 = arith.mulf %115, %50 : vector<1x8x8xf32>
    %117 = vector.extract_strided_slice %16 {offsets = [7, 0, 0], sizes = [1, 8, 8], strides = [1, 1, 1]} : vector<8x8x8xf32> to vector<1x8x8xf32>
    %118 = arith.addf %117, %67 : vector<1x8x8xf32>
    %cst_53 = arith.constant 6.250000e-02 : f32
    %119 = vector.broadcast %cst_53 : f32 to vector<1x8x8xf32>
    %120 = arith.mulf %119, %118 : vector<1x8x8xf32>
    %121 = arith.addf %116, %120 : vector<1x8x8xf32>
    %122 = vector.extract_strided_slice %33 {offsets = [7, 0, 0], sizes = [1, 8, 8], strides = [1, 1, 1]} : vector<8x8x8xf32> to vector<1x8x8xf32>
    %123 = arith.addf %122, %84 : vector<1x8x8xf32>
    %cst_54 = arith.constant 2.500000e-01 : f32
    %124 = vector.broadcast %cst_54 : f32 to vector<1x8x8xf32>
    %125 = arith.mulf %124, %123 : vector<1x8x8xf32>
    %126 = arith.addf %121, %125 : vector<1x8x8xf32>
    %c6 = arith.constant 6 : index
    %c0_55 = arith.constant 0 : index
    %c0_56 = arith.constant 0 : index
    %127 = vector.load %arg12[%c6, %c0_55, %c0_56] : memref<8x8x8xf32, #tpu.memory_space<vmem>>, vector<1x8x8xf32>
    tpu.vector_store %arg12[%c6, %c0_55, %c0_56], %114 {strides = array<i32>} : memref<8x8x8xf32, #tpu.memory_space<vmem>>, vector<1x8x8xf32>,
    %c7 = arith.constant 7 : index
    %c0_57 = arith.constant 0 : index
    %c0_58 = arith.constant 0 : index
    %128 = vector.load %arg12[%c7, %c0_57, %c0_58] : memref<8x8x8xf32, #tpu.memory_space<vmem>>, vector<1x8x8xf32>
    tpu.vector_store %arg12[%c7, %c0_57, %c0_58], %126 {strides = array<i32>} : memref<8x8x8xf32, #tpu.memory_space<vmem>>, vector<1x8x8xf32>,
    return
  }
  func.func @transform_0(%arg0: i32, %arg1: i32) -> (i32, i32, i32) {
    %c0_i32 = arith.constant 0 : i32
    %c0_i32_0 = arith.constant 0 : i32
    return %arg1, %c0_i32, %arg0 : i32, i32, i32
  }
  func.func @transform_1(%arg0: i32, %arg1: i32) -> (i32, i32, i32) {
    %c0_i32 = arith.constant 0 : i32
    %c0_i32_0 = arith.constant 0 : i32
    return %arg1, %c0_i32, %arg0 : i32, i32, i32
  }
  func.func @transform_2(%arg0: i32, %arg1: i32) -> (i32, i32, i32) {
    %c0_i32 = arith.constant 0 : i32
    %c0_i32_0 = arith.constant 0 : i32
    return %arg1, %c0_i32, %arg0 : i32, i32, i32
  }
  func.func @transform_3(%arg0: i32, %arg1: i32) -> (i32, i32, i32) {
    %c0_i32 = arith.constant 0 : i32
    %c0_i32_0 = arith.constant 0 : i32
    return %arg1, %c0_i32, %arg0 : i32, i32, i32
  }
  func.func @transform_4(%arg0: i32, %arg1: i32) -> (i32, i32, i32) {
    %c8_i32 = arith.constant 8 : i32
    %0 = arith.muli %arg1, %c8_i32 : i32
    %c8_i32_0 = arith.constant 8 : i32
    %1 = arith.addi %0, %c8_i32_0 : i32
    %c0_i32 = arith.constant 0 : i32
    %2 = arith.addi %1, %c0_i32 : i32
    %c0_i32_1 = arith.constant 0 : i32
    %c0_i32_2 = arith.constant 0 : i32
    return %2, %c0_i32_1, %arg0 : i32, i32, i32
  }
  func.func @transform_5(%arg0: i32, %arg1: i32) -> (i32, i32, i32) {
    %c8_i32 = arith.constant 8 : i32
    %0 = arith.muli %arg1, %c8_i32 : i32
    %c8_i32_0 = arith.constant 8 : i32
    %1 = arith.addi %0, %c8_i32_0 : i32
    %c1_i32 = arith.constant 1 : i32
    %2 = arith.addi %1, %c1_i32 : i32
    %c0_i32 = arith.constant 0 : i32
    %c0_i32_1 = arith.constant 0 : i32
    return %2, %c0_i32, %arg0 : i32, i32, i32
  }
  func.func @transform_6(%arg0: i32, %arg1: i32) -> (i32, i32, i32) {
    %c8_i32 = arith.constant 8 : i32
    %0 = arith.muli %arg1, %c8_i32 : i32
    %c8_i32_0 = arith.constant 8 : i32
    %1 = arith.addi %0, %c8_i32_0 : i32
    %c0_i32 = arith.constant 0 : i32
    %2 = arith.addi %1, %c0_i32 : i32
    %c0_i32_1 = arith.constant 0 : i32
    %c0_i32_2 = arith.constant 0 : i32
    return %2, %c0_i32_1, %arg0 : i32, i32, i32
  }
  func.func @transform_7(%arg0: i32, %arg1: i32) -> (i32, i32, i32) {
    %c8_i32 = arith.constant 8 : i32
    %0 = arith.muli %arg1, %c8_i32 : i32
    %c8_i32_0 = arith.constant 8 : i32
    %1 = arith.addi %0, %c8_i32_0 : i32
    %c1_i32 = arith.constant 1 : i32
    %2 = arith.addi %1, %c1_i32 : i32
    %c0_i32 = arith.constant 0 : i32
    %c0_i32_1 = arith.constant 0 : i32
    return %2, %c0_i32, %arg0 : i32, i32, i32
  }
  func.func @transform_8(%arg0: i32, %arg1: i32) -> (i32, i32, i32) {
    %c8_i32 = arith.constant 8 : i32
    %0 = arith.muli %arg1, %c8_i32 : i32
    %c8_i32_0 = arith.constant 8 : i32
    %1 = arith.addi %0, %c8_i32_0 : i32
    %c0_i32 = arith.constant 0 : i32
    %2 = arith.addi %1, %c0_i32 : i32
    %c0_i32_1 = arith.constant 0 : i32
    %c0_i32_2 = arith.constant 0 : i32
    return %2, %c0_i32_1, %arg0 : i32, i32, i32
  }
  func.func @transform_9(%arg0: i32, %arg1: i32) -> (i32, i32, i32) {
    %c8_i32 = arith.constant 8 : i32
    %0 = arith.muli %arg1, %c8_i32 : i32
    %c8_i32_0 = arith.constant 8 : i32
    %1 = arith.addi %0, %c8_i32_0 : i32
    %c0_i32 = arith.constant 0 : i32
    %2 = arith.addi %1, %c0_i32 : i32
    %c0_i32_1 = arith.constant 0 : i32
    %c0_i32_2 = arith.constant 0 : i32
    return %2, %c0_i32_1, %arg0 : i32, i32, i32
  }
  func.func @transform_10(%arg0: i32, %arg1: i32) -> (i32, i32, i32) {
    %c0_i32 = arith.constant 0 : i32
    %c0_i32_0 = arith.constant 0 : i32
    return %arg1, %c0_i32, %arg0 : i32, i32, i32
  }
}

</mosaic_0001>

<llo_original>
// kernel: tpu_custom_call.1
$region0: #{tpu_custom_call.1}
  #allocation0 [shape = 'u32[]', space=smem, size = 0x4, offset = 0x4, fixed_abs, tag = 'smem constant byte address 0x4 - core index']
  #allocation1 [shape = 'u32[144,128]{1,0:T(1,128)}', space=vmem, size = 0x12000, scoped, tag = 'internal scratch']
  %s0 = inlined_call_operand.vmem [shape: f32[10,10,8], index: 0, kind: input, shape index: {}]
  %s1 = inlined_call_operand.vmem [shape: f32[10,10,8], index: 1, kind: input, shape index: {}]
  %s2 = inlined_call_operand.vmem [shape: f32[10,10,8], index: 2, kind: input, shape index: {}]
  %s3 = inlined_call_operand.vmem [shape: f32[10,10,8], index: 3, kind: input, shape index: {}]
  %s4 = inlined_call_operand.vmem [shape: f32[10,10,8], index: 4, kind: input, shape index: {}]
  %s5 = inlined_call_operand.vmem [shape: f32[10,10,8], index: 5, kind: input, shape index: {}]
  %s6 = inlined_call_operand.vmem [shape: f32[10,10,8], index: 6, kind: input, shape index: {}]
  %s7 = inlined_call_operand.vmem [shape: f32[10,10,8], index: 7, kind: input, shape index: {}]
  %s8 = inlined_call_operand.vmem [shape: f32[10,10,8], index: 8, kind: input, shape index: {}]
  %s9 = inlined_call_operand.vmem [shape: f32[10,10,8], index: 9, kind: input, shape index: {}]
  %s10 = inlined_call_operand.hbm [shape: f32[8,8,8], index: 10, kind: output, shape index: {}]
  %s11 = sld [smem:[#allocation0]]
  $region50: #{tpu_custom_call.1} parent=0
    _
  %s13 = ssub.s32 1, %s11
  %s14 = scalar_select 0, %s13, %s11
  $region1: #{tpu_custom_call.1} parent=0
    #allocation2 [shape = 'u8[32768]{0}', space=vmem, size = 0x8000, scoped, tag = 'output window, operand 0, single buffered']
    #allocation3 [shape = 's32[1]{0}', space=sflag, size = 0x4, scoped, tag = 'scoped memory for tpu_custom_call.1']
    %15 = vsyncpa [#allocation3], 0
    // Predicated region
    $region2: #{tpu_custom_call.1} parent=1 // pred_check
      _
    $region3: #{tpu_custom_call.1} parent=1 // pred_check_branch
      %17 = sbr.rel (0) target = $region5
    $region4: #{tpu_custom_call.1} parent=1 // pred_region
      _
    $region5: #{tpu_custom_call.1} parent=1 // pred_fallthru
      _
    // Predicated region
    $region6: #{tpu_custom_call.1} parent=1 // pred_check
      _
    $region7: #{tpu_custom_call.1} parent=1 // pred_check_branch
      %19 = sbr.rel (0) target = $region9
    $region8: #{tpu_custom_call.1} parent=1 // pred_region
      _
    $region9: #{tpu_custom_call.1} parent=1 // pred_fallthru
      _
    // Predicated region
    $region10: #{tpu_custom_call.1} parent=1 // pred_check
      _
    $region11: #{tpu_custom_call.1} parent=1 // pred_check_branch
      %21 = sbr.rel (0) target = $region13
    $region12: #{tpu_custom_call.1} parent=1 // pred_region
      _
    $region13: #{tpu_custom_call.1} parent=1 // pred_fallthru
      _
    // Predicated region
    $region14: #{tpu_custom_call.1} parent=1 // pred_check
      _
    $region15: #{tpu_custom_call.1} parent=1 // pred_check_branch
      %23 = sbr.rel (0) target = $region17
    $region16: #{tpu_custom_call.1} parent=1 // pred_region
      _
    $region17: #{tpu_custom_call.1} parent=1 // pred_fallthru
      _
    // Predicated region
    $region18: #{tpu_custom_call.1} parent=1 // pred_check
      _
    $region19: #{tpu_custom_call.1} parent=1 // pred_check_branch
      %25 = sbr.rel (0) target = $region21
    $region20: #{tpu_custom_call.1} parent=1 // pred_region
      %s26 = smul.u32 0, 8
      %s27 = sadd.s32 %s26, 8
      %p28 = scmp.lt.s32.totalorder %s27, 9
      %s29 = scalar_select %p28, %s27, 9
      %s30 = smul.addr %s29, 2
      %s31 = smul.addr %s30, 8
      %s32 = scalar_lea.vmem %s4, %s31
      %s33 = smul.u32 0, 8
      %s34 = sadd.s32 %s33, 8
    $region21: #{tpu_custom_call.1} parent=1 // pred_fallthru
      _
    // Predicated region
    $region22: #{tpu_custom_call.1} parent=1 // pred_check
      _
    $region23: #{tpu_custom_call.1} parent=1 // pred_check_branch
      %36 = sbr.rel (0) target = $region25
    $region24: #{tpu_custom_call.1} parent=1 // pred_region
      %s37 = smul.u32 0, 8
      %s38 = sadd.s32 %s37, 9
      %p39 = scmp.lt.s32.totalorder %s38, 9
      %s40 = scalar_select %p39, %s38, 9
      %s41 = smul.addr %s40, 2
      %s42 = smul.addr %s41, 8
      %s43 = scalar_lea.vmem %s5, %s42
      %s44 = smul.u32 0, 8
      %s45 = sadd.s32 %s44, 9
    $region25: #{tpu_custom_call.1} parent=1 // pred_fallthru
      _
    // Predicated region
    $region26: #{tpu_custom_call.1} parent=1 // pred_check
      _
    $region27: #{tpu_custom_call.1} parent=1 // pred_check_branch
      %47 = sbr.rel (0) target = $region29
    $region28: #{tpu_custom_call.1} parent=1 // pred_region
      %s48 = smul.u32 0, 8
      %s49 = sadd.s32 %s48, 8
      %p50 = scmp.lt.s32.totalorder %s49, 9
      %s51 = scalar_select %p50, %s49, 9
      %s52 = smul.addr %s51, 2
      %s53 = smul.addr %s52, 8
      %s54 = scalar_lea.vmem %s6, %s53
      %s55 = smul.u32 0, 8
      %s56 = sadd.s32 %s55, 8
    $region29: #{tpu_custom_call.1} parent=1 // pred_fallthru
      _
    // Predicated region
    $region30: #{tpu_custom_call.1} parent=1 // pred_check
      _
    $region31: #{tpu_custom_call.1} parent=1 // pred_check_branch
      %58 = sbr.rel (0) target = $region33
    $region32: #{tpu_custom_call.1} parent=1 // pred_region
      %s59 = smul.u32 0, 8
      %s60 = sadd.s32 %s59, 9
      %p61 = scmp.lt.s32.totalorder %s60, 9
      %s62 = scalar_select %p61, %s60, 9
      %s63 = smul.addr %s62, 2
      %s64 = smul.addr %s63, 8
      %s65 = scalar_lea.vmem %s7, %s64
      %s66 = smul.u32 0, 8
      %s67 = sadd.s32 %s66, 9
    $region33: #{tpu_custom_call.1} parent=1 // pred_fallthru
      _
    // Predicated region
    $region34: #{tpu_custom_call.1} parent=1 // pred_check
      _
    $region35: #{tpu_custom_call.1} parent=1 // pred_check_branch
      %69 = sbr.rel (0) target = $region37
    $region36: #{tpu_custom_call.1} parent=1 // pred_region
      %s70 = smul.u32 0, 8
      %s71 = sadd.s32 %s70, 8
      %p72 = scmp.lt.s32.totalorder %s71, 9
      %s73 = scalar_select %p72, %s71, 9
      %s74 = smul.addr %s73, 2
      %s75 = smul.addr %s74, 8
      %s76 = scalar_lea.vmem %s8, %s75
      %s77 = smul.u32 0, 8
      %s78 = sadd.s32 %s77, 8
    $region37: #{tpu_custom_call.1} parent=1 // pred_fallthru
      _
    // Predicated region
    $region38: #{tpu_custom_call.1} parent=1 // pred_check
      _
    $region39: #{tpu_custom_call.1} parent=1 // pred_check_branch
      %80 = sbr.rel (0) target = $region41
    $region40: #{tpu_custom_call.1} parent=1 // pred_region
      %s81 = smul.u32 0, 8
      %s82 = sadd.s32 %s81, 8
      %p83 = scmp.lt.s32.totalorder %s82, 9
      %s84 = scalar_select %p83, %s82, 9
      %s85 = smul.addr %s84, 2
      %s86 = smul.addr %s85, 8
      %s87 = scalar_lea.vmem %s9, %s86
      %s88 = smul.u32 0, 8
      %s89 = sadd.s32 %s88, 8
    $region41: #{tpu_custom_call.1} parent=1 // pred_fallthru
      _
    %s90 = smul.u32 0, 8
    %s91 = sadd.s32 %s90, 8
    %p92 = scmp.lt.s32.totalorder %s91, 9
    %s93 = scalar_select %p92, %s91, 9
    %s94 = smul.addr %s93, 2
    %s95 = smul.addr %s94, 8
    %s96 = scalar_lea.vmem %s4, %s95
    %s97 = smul.u32 0, 8
    %s98 = sadd.s32 %s97, 9
    %p99 = scmp.lt.s32.totalorder %s98, 9
    %s100 = scalar_select %p99, %s98, 9
    %s101 = smul.addr %s100, 2
    %s102 = smul.addr %s101, 8
    %s103 = scalar_lea.vmem %s5, %s102
    %s104 = smul.u32 0, 8
    %s105 = sadd.s32 %s104, 8
    %p106 = scmp.lt.s32.totalorder %s105, 9
    %s107 = scalar_select %p106, %s105, 9
    %s108 = smul.addr %s107, 2
    %s109 = smul.addr %s108, 8
    %s110 = scalar_lea.vmem %s6, %s109
    %s111 = smul.u32 0, 8
    %s112 = sadd.s32 %s111, 9
    %p113 = scmp.lt.s32.totalorder %s112, 9
    %s114 = scalar_select %p113, %s112, 9
    %s115 = smul.addr %s114, 2
    %s116 = smul.addr %s115, 8
    %s117 = scalar_lea.vmem %s7, %s116
    %s118 = smul.u32 0, 8
    %s119 = sadd.s32 %s118, 8
    %p120 = scmp.lt.s32.totalorder %s119, 9
    %s121 = scalar_select %p120, %s119, 9
    %s122 = smul.addr %s121, 2
    %s123 = smul.addr %s122, 8
    %s124 = scalar_lea.vmem %s8, %s123
    %s125 = smul.u32 0, 8
    %s126 = sadd.s32 %s125, 8
    %p127 = scmp.lt.s32.totalorder %s126, 9
    %s128 = scalar_select %p127, %s126, 9
    %s129 = smul.addr %s128, 2
    %s130 = smul.addr %s129, 8
    %s131 = scalar_lea.vmem %s9, %s130
    %s132 = smul.u32 0, 8
    %s133 = sadd.s32 %s132, 8
    %p134 = scmp.lt.s32.totalorder %s133, 9
    %s135 = scalar_select %p134, %s133, 9
    %s136 = smul.addr %s135, 2
    %s137 = smul.addr %s136, 8
    %s138 = scalar_lea.vmem %s4, %s137
    %s139 = smul.u32 0, 8
    %s140 = sadd.s32 %s139, 8
    %s141 = smul.u32 0, 8
    %s142 = sadd.s32 %s141, 9
    %p143 = scmp.lt.s32.totalorder %s142, 9
    %s144 = scalar_select %p143, %s142, 9
    %s145 = smul.addr %s144, 2
    %s146 = smul.addr %s145, 8
    %s147 = scalar_lea.vmem %s5, %s146
    %s148 = smul.u32 0, 8
    %s149 = sadd.s32 %s148, 9
    %s150 = smul.u32 0, 8
    %s151 = sadd.s32 %s150, 8
    %p152 = scmp.lt.s32.totalorder %s151, 9
    %s153 = scalar_select %p152, %s151, 9
    %s154 = smul.addr %s153, 2
    %s155 = smul.addr %s154, 8
    %s156 = scalar_lea.vmem %s6, %s155
    %s157 = smul.u32 0, 8
    %s158 = sadd.s32 %s157, 8
    %s159 = smul.u32 0, 8
    %s160 = sadd.s32 %s159, 9
    %p161 = scmp.lt.s32.totalorder %s160, 9
    %s162 = scalar_select %p161, %s160, 9
    %s163 = smul.addr %s162, 2
    %s164 = smul.addr %s163, 8
    %s165 = scalar_lea.vmem %s7, %s164
    %s166 = smul.u32 0, 8
    %s167 = sadd.s32 %s166, 9
    %s168 = smul.u32 0, 8
    %s169 = sadd.s32 %s168, 8
    %p170 = scmp.lt.s32.totalorder %s169, 9
    %s171 = scalar_select %p170, %s169, 9
    %s172 = smul.addr %s171, 2
    %s173 = smul.addr %s172, 8
    %s174 = scalar_lea.vmem %s8, %s173
    %s175 = smul.u32 0, 8
    %s176 = sadd.s32 %s175, 8
    %s177 = smul.u32 0, 8
    %s178 = sadd.s32 %s177, 8
    %p179 = scmp.lt.s32.totalorder %s178, 9
    %s180 = scalar_select %p179, %s178, 9
    %s181 = smul.addr %s180, 2
    %s182 = smul.addr %s181, 8
    %s183 = scalar_lea.vmem %s9, %s182
    %s184 = smul.u32 0, 8
    %s185 = sadd.s32 %s184, 8
    %v186 = vld [vmem:[%s0] sm:$0xff]
    %v187 = vld [vmem:[%s0 + $0x8] sm:$0x3]
    %v188 = vld [vmem:[%s0 + $0x10] sm:$0xff]
    %v189 = vld [vmem:[%s0 + $0x18] sm:$0x3]
    %v190 = vld [vmem:[%s0 + $0x20] sm:$0xff]
    %v191 = vld [vmem:[%s0 + $0x28] sm:$0x3]
    %v192 = vld [vmem:[%s0 + $0x30] sm:$0xff]
    %v193 = vld [vmem:[%s0 + $0x38] sm:$0x3]
    %v194 = vld [vmem:[%s0 + $0x40] sm:$0xff]
    %v195 = vld [vmem:[%s0 + $0x48] sm:$0x3]
    %v196 = vld [vmem:[%s0 + $0x50] sm:$0xff]
    %v197 = vld [vmem:[%s0 + $0x58] sm:$0x3]
    %v198 = vld [vmem:[%s0 + $0x60] sm:$0xff]
    %v199 = vld [vmem:[%s0 + $0x68] sm:$0x3]
    %v200 = vld [vmem:[%s0 + $0x70] sm:$0xff]
    %v201 = vld [vmem:[%s0 + $0x78] sm:$0x3]
    %v202 = vld [vmem:[%s1] sm:$0xff]
    %v203 = vld [vmem:[%s1 + $0x8] sm:$0x3]
    %v204 = vld [vmem:[%s1 + $0x10] sm:$0xff]
    %v205 = vld [vmem:[%s1 + $0x18] sm:$0x3]
    %v206 = vld [vmem:[%s1 + $0x20] sm:$0xff]
    %v207 = vld [vmem:[%s1 + $0x28] sm:$0x3]
    %v208 = vld [vmem:[%s1 + $0x30] sm:$0xff]
    %v209 = vld [vmem:[%s1 + $0x38] sm:$0x3]
    %v210 = vld [vmem:[%s1 + $0x40] sm:$0xff]
    %v211 = vld [vmem:[%s1 + $0x48] sm:$0x3]
    %v212 = vld [vmem:[%s1 + $0x50] sm:$0xff]
    %v213 = vld [vmem:[%s1 + $0x58] sm:$0x3]
    %v214 = vld [vmem:[%s1 + $0x60] sm:$0xff]
    %v215 = vld [vmem:[%s1 + $0x68] sm:$0x3]
    %v216 = vld [vmem:[%s1 + $0x70] sm:$0xff]
    %v217 = vld [vmem:[%s1 + $0x78] sm:$0x3]
    %v218 = vmul.f32 %v186, 0.375
    %v219 = vmul.f32 %v187, 0.375
    %v220 = vmul.f32 %v188, 0.375
    %v221 = vmul.f32 %v189, 0.375
    %v222 = vmul.f32 %v190, 0.375
    %v223 = vmul.f32 %v191, 0.375
    %v224 = vmul.f32 %v192, 0.375
    %v225 = vmul.f32 %v193, 0.375
    %v226 = vmul.f32 %v194, 0.375
    %v227 = vmul.f32 %v195, 0.375
    %v228 = vmul.f32 %v196, 0.375
    %v229 = vmul.f32 %v197, 0.375
    %v230 = vmul.f32 %v198, 0.375
    %v231 = vmul.f32 %v199, 0.375
    %v232 = vmul.f32 %v200, 0.375
    %v233 = vmul.f32 %v201, 0.375
    %vm250 = vcmask 1045504
    %v251 = vrot.slane %v186, 2
    %v252 = vrot.slane %v187, 2
    %v253 = vsel %vm250, %v251, %v252
    %v254 = vrot.slane %v188, 2
    %v255 = vrot.slane %v189, 2
    %v256 = vsel %vm250, %v254, %v255
    %v257 = vrot.slane %v190, 2
    %v258 = vrot.slane %v191, 2
    %v259 = vsel %vm250, %v257, %v258
    %v260 = vrot.slane %v192, 2
    %v261 = vrot.slane %v193, 2
    %v262 = vsel %vm250, %v260, %v261
    %v263 = vrot.slane %v194, 2
    %v264 = vrot.slane %v195, 2
    %v265 = vsel %vm250, %v263, %v264
    %v266 = vrot.slane %v196, 2
    %v267 = vrot.slane %v197, 2
    %v268 = vsel %vm250, %v266, %v267
    %v269 = vrot.slane %v198, 2
    %v270 = vrot.slane %v199, 2
    %v271 = vsel %vm250, %v269, %v270
    %v272 = vrot.slane %v200, 2
    %v273 = vrot.slane %v201, 2
    %v274 = vsel %vm250, %v272, %v273
    %v283 = vadd.f32 %v186, %v253
    %v284 = vadd.f32 %v188, %v256
    %v285 = vadd.f32 %v190, %v259
    %v286 = vadd.f32 %v192, %v262
    %v287 = vadd.f32 %v194, %v265
    %v288 = vadd.f32 %v196, %v268
    %v289 = vadd.f32 %v198, %v271
    %v290 = vadd.f32 %v200, %v274
    %v291 = vmul.f32 %v283, 0.0625
    %v292 = vmul.f32 %v284, 0.0625
    %v293 = vmul.f32 %v285, 0.0625
    %v294 = vmul.f32 %v286, 0.0625
    %v295 = vmul.f32 %v287, 0.0625
    %v296 = vmul.f32 %v288, 0.0625
    %v297 = vmul.f32 %v289, 0.0625
    %v298 = vmul.f32 %v290, 0.0625
    %v307 = vrot.slane %v291, 7
    %v308 = vrot.slane %v292, 7
    %v309 = vrot.slane %v293, 7
    %v310 = vrot.slane %v294, 7
    %v311 = vrot.slane %v295, 7
    %v312 = vrot.slane %v296, 7
    %v313 = vrot.slane %v297, 7
    %v314 = vrot.slane %v298, 7
    %v323 = vadd.f32 %v218, %v307
    %v324 = vadd.f32 %v219, %v307
    %v325 = vadd.f32 %v220, %v308
    %v326 = vadd.f32 %v221, %v308
    %v327 = vadd.f32 %v222, %v309
    %v328 = vadd.f32 %v223, %v309
    %v329 = vadd.f32 %v224, %v310
    %v330 = vadd.f32 %v225, %v310
    %v331 = vadd.f32 %v226, %v311
    %v332 = vadd.f32 %v227, %v311
    %v333 = vadd.f32 %v228, %v312
    %v334 = vadd.f32 %v229, %v312
    %v335 = vadd.f32 %v230, %v313
    %v336 = vadd.f32 %v231, %v313
    %v337 = vadd.f32 %v232, %v314
    %v338 = vadd.f32 %v233, %v314
    %vm355 = vcmask 1046528
    %v356 = vrot.slane %v202, 1
    %v357 = vrot.slane %v203, 1
    %v358 = vsel %vm355, %v356, %v357
    %v359 = vrot.slane %v204, 1
    %v360 = vrot.slane %v205, 1
    %v361 = vsel %vm355, %v359, %v360
    %v362 = vrot.slane %v206, 1
    %v363 = vrot.slane %v207, 1
    %v364 = vsel %vm355, %v362, %v363
    %v365 = vrot.slane %v208, 1
    %v366 = vrot.slane %v209, 1
    %v367 = vsel %vm355, %v365, %v366
    %v368 = vrot.slane %v210, 1
    %v369 = vrot.slane %v211, 1
    %v370 = vsel %vm355, %v368, %v369
    %v371 = vrot.slane %v212, 1
    %v372 = vrot.slane %v213, 1
    %v373 = vsel %vm355, %v371, %v372
    %v374 = vrot.slane %v214, 1
    %v375 = vrot.slane %v215, 1
    %v376 = vsel %vm355, %v374, %v375
    %v377 = vrot.slane %v216, 1
    %v378 = vrot.slane %v217, 1
    %v379 = vsel %vm355, %v377, %v378
    %v388 = vadd.f32 %v202, %v358
    %v389 = vadd.f32 %v204, %v361
    %v390 = vadd.f32 %v206, %v364
    %v391 = vadd.f32 %v208, %v367
    %v392 = vadd.f32 %v210, %v370
    %v393 = vadd.f32 %v212, %v373
    %v394 = vadd.f32 %v214, %v376
    %v395 = vadd.f32 %v216, %v379
    %v396 = vmul.f32 %v388, 0.25
    %v397 = vmul.f32 %v389, 0.25
    %v398 = vmul.f32 %v390, 0.25
    %v399 = vmul.f32 %v391, 0.25
    %v400 = vmul.f32 %v392, 0.25
    %v401 = vmul.f32 %v393, 0.25
    %v402 = vmul.f32 %v394, 0.25
    %v403 = vmul.f32 %v395, 0.25
    %v412 = vrot.slane %v396, 7
    %v413 = vrot.slane %v397, 7
    %v414 = vrot.slane %v398, 7
    %v415 = vrot.slane %v399, 7
    %v416 = vrot.slane %v400, 7
    %v417 = vrot.slane %v401, 7
    %v418 = vrot.slane %v402, 7
    %v419 = vrot.slane %v403, 7
    %v428 = vadd.f32 %v323, %v412
    %v429 = vadd.f32 %v324, %v412
    %v430 = vadd.f32 %v325, %v413
    %v431 = vadd.f32 %v326, %v413
    %v432 = vadd.f32 %v327, %v414
    %v433 = vadd.f32 %v328, %v414
    %v434 = vadd.f32 %v329, %v415
    %v435 = vadd.f32 %v330, %v415
    %v436 = vadd.f32 %v331, %v416
    %v437 = vadd.f32 %v332, %v416
    %v438 = vadd.f32 %v333, %v417
    %v439 = vadd.f32 %v334, %v417
    %v440 = vadd.f32 %v335, %v418
    %v441 = vadd.f32 %v336, %v418
    %v442 = vadd.f32 %v337, %v419
    %v443 = vadd.f32 %v338, %v419
    %v444 = vld [vmem:[%s2] sm:$0xff]
    %v445 = vld [vmem:[%s2 + $0x8] sm:$0x3]
    %v446 = vld [vmem:[%s2 + $0x10] sm:$0xff]
    %v447 = vld [vmem:[%s2 + $0x18] sm:$0x3]
    %v448 = vld [vmem:[%s2 + $0x20] sm:$0xff]
    %v449 = vld [vmem:[%s2 + $0x28] sm:$0x3]
    %v450 = vld [vmem:[%s2 + $0x30] sm:$0xff]
    %v451 = vld [vmem:[%s2 + $0x38] sm:$0x3]
    %v452 = vld [vmem:[%s2 + $0x40] sm:$0xff]
    %v453 = vld [vmem:[%s2 + $0x48] sm:$0x3]
    %v454 = vld [vmem:[%s2 + $0x50] sm:$0xff]
    %v455 = vld [vmem:[%s2 + $0x58] sm:$0x3]
    %v456 = vld [vmem:[%s2 + $0x60] sm:$0xff]
    %v457 = vld [vmem:[%s2 + $0x68] sm:$0x3]
    %v458 = vld [vmem:[%s2 + $0x70] sm:$0xff]
    %v459 = vld [vmem:[%s2 + $0x78] sm:$0x3]
    %v460 = vld [vmem:[%s3] sm:$0xff]
    %v461 = vld [vmem:[%s3 + $0x8] sm:$0x3]
    %v462 = vld [vmem:[%s3 + $0x10] sm:$0xff]
    %v463 = vld [vmem:[%s3 + $0x18] sm:$0x3]
    %v464 = vld [vmem:[%s3 + $0x20] sm:$0xff]
    %v465 = vld [vmem:[%s3 + $0x28] sm:$0x3]
    %v466 = vld [vmem:[%s3 + $0x30] sm:$0xff]
    %v467 = vld [vmem:[%s3 + $0x38] sm:$0x3]
    %v468 = vld [vmem:[%s3 + $0x40] sm:$0xff]
    %v469 = vld [vmem:[%s3 + $0x48] sm:$0x3]
    %v470 = vld [vmem:[%s3 + $0x50] sm:$0xff]
    %v471 = vld [vmem:[%s3 + $0x58] sm:$0x3]
    %v472 = vld [vmem:[%s3 + $0x60] sm:$0xff]
    %v473 = vld [vmem:[%s3 + $0x68] sm:$0x3]
    %v474 = vld [vmem:[%s3 + $0x70] sm:$0xff]
    %v475 = vld [vmem:[%s3 + $0x78] sm:$0x3]
    %v476 = vmul.f32 %v444, 0.375
    %v477 = vmul.f32 %v445, 0.375
    %v478 = vmul.f32 %v446, 0.375
    %v479 = vmul.f32 %v447, 0.375
    %v480 = vmul.f32 %v448, 0.375
    %v481 = vmul.f32 %v449, 0.375
    %v482 = vmul.f32 %v450, 0.375
    %v483 = vmul.f32 %v451, 0.375
    %v484 = vmul.f32 %v452, 0.375
    %v485 = vmul.f32 %v453, 0.375
    %v486 = vmul.f32 %v454, 0.375
    %v487 = vmul.f32 %v455, 0.375
    %v488 = vmul.f32 %v456, 0.375
    %v489 = vmul.f32 %v457, 0.375
    %v490 = vmul.f32 %v458, 0.375
    %v491 = vmul.f32 %v459, 0.375
    %v508 = vrot.slane %v444, 2
    %v509 = vrot.slane %v445, 2
    %v510 = vsel %vm250, %v508, %v509
    %v511 = vrot.slane %v446, 2
    %v512 = vrot.slane %v447, 2
    %v513 = vsel %vm250, %v511, %v512
    %v514 = vrot.slane %v448, 2
    %v515 = vrot.slane %v449, 2
    %v516 = vsel %vm250, %v514, %v515
    %v517 = vrot.slane %v450, 2
    %v518 = vrot.slane %v451, 2
    %v519 = vsel %vm250, %v517, %v518
    %v520 = vrot.slane %v452, 2
    %v521 = vrot.slane %v453, 2
    %v522 = vsel %vm250, %v520, %v521
    %v523 = vrot.slane %v454, 2
    %v524 = vrot.slane %v455, 2
    %v525 = vsel %vm250, %v523, %v524
    %v526 = vrot.slane %v456, 2
    %v527 = vrot.slane %v457, 2
    %v528 = vsel %vm250, %v526, %v527
    %v529 = vrot.slane %v458, 2
    %v530 = vrot.slane %v459, 2
    %v531 = vsel %vm250, %v529, %v530
    %v540 = vadd.f32 %v444, %v510
    %v541 = vadd.f32 %v446, %v513
    %v542 = vadd.f32 %v448, %v516
    %v543 = vadd.f32 %v450, %v519
    %v544 = vadd.f32 %v452, %v522
    %v545 = vadd.f32 %v454, %v525
    %v546 = vadd.f32 %v456, %v528
    %v547 = vadd.f32 %v458, %v531
    %v548 = vmul.f32 %v540, 0.0625
    %v549 = vmul.f32 %v541, 0.0625
    %v550 = vmul.f32 %v542, 0.0625
    %v551 = vmul.f32 %v543, 0.0625
    %v552 = vmul.f32 %v544, 0.0625
    %v553 = vmul.f32 %v545, 0.0625
    %v554 = vmul.f32 %v546, 0.0625
    %v555 = vmul.f32 %v547, 0.0625
    %v564 = vrot.slane %v548, 7
    %v565 = vrot.slane %v549, 7
    %v566 = vrot.slane %v550, 7
    %v567 = vrot.slane %v551, 7
    %v568 = vrot.slane %v552, 7
    %v569 = vrot.slane %v553, 7
    %v570 = vrot.slane %v554, 7
    %v571 = vrot.slane %v555, 7
    %v580 = vadd.f32 %v476, %v564
    %v581 = vadd.f32 %v477, %v564
    %v582 = vadd.f32 %v478, %v565
    %v583 = vadd.f32 %v479, %v565
    %v584 = vadd.f32 %v480, %v566
    %v585 = vadd.f32 %v481, %v566
    %v586 = vadd.f32 %v482, %v567
    %v587 = vadd.f32 %v483, %v567
    %v588 = vadd.f32 %v484, %v568
    %v589 = vadd.f32 %v485, %v568
    %v590 = vadd.f32 %v486, %v569
    %v591 = vadd.f32 %v487, %v569
    %v592 = vadd.f32 %v488, %v570
    %v593 = vadd.f32 %v489, %v570
    %v594 = vadd.f32 %v490, %v571
    %v595 = vadd.f32 %v491, %v571
    %v612 = vrot.slane %v460, 1
    %v613 = vrot.slane %v461, 1
    %v614 = vsel %vm355, %v612, %v613
    %v615 = vrot.slane %v462, 1
    %v616 = vrot.slane %v463, 1
    %v617 = vsel %vm355, %v615, %v616
    %v618 = vrot.slane %v464, 1
    %v619 = vrot.slane %v465, 1
    %v620 = vsel %vm355, %v618, %v619
    %v621 = vrot.slane %v466, 1
    %v622 = vrot.slane %v467, 1
    %v623 = vsel %vm355, %v621, %v622
    %v624 = vrot.slane %v468, 1
    %v625 = vrot.slane %v469, 1
    %v626 = vsel %vm355, %v624, %v625
    %v627 = vrot.slane %v470, 1
    %v628 = vrot.slane %v471, 1
    %v629 = vsel %vm355, %v627, %v628
    %v630 = vrot.slane %v472, 1
    %v631 = vrot.slane %v473, 1
    %v632 = vsel %vm355, %v630, %v631
    %v633 = vrot.slane %v474, 1
    %v634 = vrot.slane %v475, 1
    %v635 = vsel %vm355, %v633, %v634
    %v644 = vadd.f32 %v460, %v614
    %v645 = vadd.f32 %v462, %v617
    %v646 = vadd.f32 %v464, %v620
    %v647 = vadd.f32 %v466, %v623
    %v648 = vadd.f32 %v468, %v626
    %v649 = vadd.f32 %v470, %v629
    %v650 = vadd.f32 %v472, %v632
    %v651 = vadd.f32 %v474, %v635
    %v652 = vmul.f32 %v644, 0.25
    %v653 = vmul.f32 %v645, 0.25
    %v654 = vmul.f32 %v646, 0.25
    %v655 = vmul.f32 %v647, 0.25
    %v656 = vmul.f32 %v648, 0.25
    %v657 = vmul.f32 %v649, 0.25
    %v658 = vmul.f32 %v650, 0.25
    %v659 = vmul.f32 %v651, 0.25
    %v668 = vrot.slane %v652, 7
    %v669 = vrot.slane %v653, 7
    %v670 = vrot.slane %v654, 7
    %v671 = vrot.slane %v655, 7
    %v672 = vrot.slane %v656, 7
    %v673 = vrot.slane %v657, 7
    %v674 = vrot.slane %v658, 7
    %v675 = vrot.slane %v659, 7
    %v684 = vadd.f32 %v580, %v668
    %v685 = vadd.f32 %v581, %v668
    %v686 = vadd.f32 %v582, %v669
    %v687 = vadd.f32 %v583, %v669
    %v688 = vadd.f32 %v584, %v670
    %v689 = vadd.f32 %v585, %v670
    %v690 = vadd.f32 %v586, %v671
    %v691 = vadd.f32 %v587, %v671
    %v692 = vadd.f32 %v588, %v672
    %v693 = vadd.f32 %v589, %v672
    %v694 = vadd.f32 %v590, %v673
    %v695 = vadd.f32 %v591, %v673
    %v696 = vadd.f32 %v592, %v674
    %v697 = vadd.f32 %v593, %v674
    %v698 = vadd.f32 %v594, %v675
    %v699 = vadd.f32 %v595, %v675
    %v700 = vld [vmem:[%s138] sm:$0xff]
    %v701 = vld [vmem:[%s138 + $0x8] sm:$0x3]
    %v702 = vld [vmem:[%s156] sm:$0xff]
    %v703 = vld [vmem:[%s156 + $0x8] sm:$0x3]
    %v704 = vmul.f32 %v700, 0.375
    %v705 = vmul.f32 %v701, 0.375
    %v708 = vrot.slane %v700, 2
    %v709 = vrot.slane %v701, 2
    %v710 = vsel %vm250, %v708, %v709
    %v712 = vadd.f32 %v700, %v710
    %v713 = vmul.f32 %v712, 0.0625
    %v715 = vrot.slane %v713, 7
    %v717 = vadd.f32 %v704, %v715
    %v718 = vadd.f32 %v705, %v715
    %v721 = vrot.slane %v702, 1
    %v722 = vrot.slane %v703, 1
    %v723 = vsel %vm355, %v721, %v722
    %v725 = vadd.f32 %v702, %v723
    %v726 = vmul.f32 %v725, 0.25
    %v728 = vrot.slane %v726, 7
    %v730 = vadd.f32 %v717, %v728
    %v731 = vadd.f32 %v718, %v728
    %v732 = vld [vmem:[%s147] sm:$0xff]
    %v733 = vld [vmem:[%s147 + $0x8] sm:$0x3]
    %v734 = vld [vmem:[%s165] sm:$0xff]
    %v735 = vld [vmem:[%s165 + $0x8] sm:$0x3]
    %v736 = vmul.f32 %v732, 0.375
    %v737 = vmul.f32 %v733, 0.375
    %v740 = vrot.slane %v732, 2
    %v741 = vrot.slane %v733, 2
    %v742 = vsel %vm250, %v740, %v741
    %v744 = vadd.f32 %v732, %v742
    %v745 = vmul.f32 %v744, 0.0625
    %v747 = vrot.slane %v745, 7
    %v749 = vadd.f32 %v736, %v747
    %v750 = vadd.f32 %v737, %v747
    %v753 = vrot.slane %v734, 1
    %v754 = vrot.slane %v735, 1
    %v755 = vsel %vm355, %v753, %v754
    %v757 = vadd.f32 %v734, %v755
    %v758 = vmul.f32 %v757, 0.25
    %v760 = vrot.slane %v758, 7
    %v762 = vadd.f32 %v749, %v760
    %v763 = vadd.f32 %v750, %v760
    %v764 = vld [vmem:[%s174] sm:$0xff]
    %v765 = vld [vmem:[%s174 + $0x8] sm:$0x3]
    %v766 = vld [vmem:[%s183] sm:$0xff]
    %v767 = vld [vmem:[%s183 + $0x8] sm:$0x3]
    %v768 = vmul.f32 %v764, 0.375
    %v769 = vmul.f32 %v765, 0.375
    %v772 = vrot.slane %v764, 2
    %v773 = vrot.slane %v765, 2
    %v774 = vsel %vm250, %v772, %v773
    %v776 = vadd.f32 %v764, %v774
    %v777 = vmul.f32 %v776, 0.0625
    %v779 = vrot.slane %v777, 7
    %v781 = vadd.f32 %v768, %v779
    %v782 = vadd.f32 %v769, %v779
    %v785 = vrot.slane %v766, 1
    %v786 = vrot.slane %v767, 1
    %v787 = vsel %vm355, %v785, %v786
    %v789 = vadd.f32 %v766, %v787
    %v790 = vmul.f32 %v789, 0.25
    %v792 = vrot.slane %v790, 7
    %v794 = vadd.f32 %v781, %v792
    %v795 = vadd.f32 %v782, %v792
    %v796 = vmul.f32 %v430, 0.375
    %v797 = vmul.f32 %v431, 0.375
    %v798 = vmul.f32 %v432, 0.375
    %v799 = vmul.f32 %v433, 0.375
    %v800 = vmul.f32 %v434, 0.375
    %v801 = vmul.f32 %v435, 0.375
    %v802 = vmul.f32 %v436, 0.375
    %v803 = vmul.f32 %v437, 0.375
    %v804 = vmul.f32 %v438, 0.375
    %v805 = vmul.f32 %v439, 0.375
    %v806 = vmul.f32 %v440, 0.375
    %v807 = vmul.f32 %v441, 0.375
    %v808 = vadd.f32 %v428, %v432
    %v809 = vadd.f32 %v429, %v433
    %v810 = vadd.f32 %v430, %v434
    %v811 = vadd.f32 %v431, %v435
    %v812 = vadd.f32 %v432, %v436
    %v813 = vadd.f32 %v433, %v437
    %v814 = vadd.f32 %v434, %v438
    %v815 = vadd.f32 %v435, %v439
    %v816 = vadd.f32 %v436, %v440
    %v817 = vadd.f32 %v437, %v441
    %v818 = vadd.f32 %v438, %v442
    %v819 = vadd.f32 %v439, %v443
    %v820 = vmul.f32 %v808, 0.0625
    %v821 = vmul.f32 %v809, 0.0625
    %v822 = vmul.f32 %v810, 0.0625
    %v823 = vmul.f32 %v811, 0.0625
    %v824 = vmul.f32 %v812, 0.0625
    %v825 = vmul.f32 %v813, 0.0625
    %v826 = vmul.f32 %v814, 0.0625
    %v827 = vmul.f32 %v815, 0.0625
    %v828 = vmul.f32 %v816, 0.0625
    %v829 = vmul.f32 %v817, 0.0625
    %v830 = vmul.f32 %v818, 0.0625
    %v831 = vmul.f32 %v819, 0.0625
    %v832 = vadd.f32 %v796, %v820
    %v833 = vadd.f32 %v797, %v821
    %v834 = vadd.f32 %v798, %v822
    %v835 = vadd.f32 %v799, %v823
    %v836 = vadd.f32 %v800, %v824
    %v837 = vadd.f32 %v801, %v825
    %v838 = vadd.f32 %v802, %v826
    %v839 = vadd.f32 %v803, %v827
    %v840 = vadd.f32 %v804, %v828
    %v841 = vadd.f32 %v805, %v829
    %v842 = vadd.f32 %v806, %v830
    %v843 = vadd.f32 %v807, %v831
    %v844 = vadd.f32 %v684, %v686
    %v845 = vadd.f32 %v685, %v687
    %v846 = vadd.f32 %v686, %v688
    %v847 = vadd.f32 %v687, %v689
    %v848 = vadd.f32 %v688, %v690
    %v849 = vadd.f32 %v689, %v691
    %v850 = vadd.f32 %v690, %v692
    %v851 = vadd.f32 %v691, %v693
    %v852 = vadd.f32 %v692, %v694
    %v853 = vadd.f32 %v693, %v695
    %v854 = vadd.f32 %v694, %v696
    %v855 = vadd.f32 %v695, %v697
    %v856 = vmul.f32 %v844, 0.25
    %v857 = vmul.f32 %v845, 0.25
    %v858 = vmul.f32 %v846, 0.25
    %v859 = vmul.f32 %v847, 0.25
    %v860 = vmul.f32 %v848, 0.25
    %v861 = vmul.f32 %v849, 0.25
    %v862 = vmul.f32 %v850, 0.25
    %v863 = vmul.f32 %v851, 0.25
    %v864 = vmul.f32 %v852, 0.25
    %v865 = vmul.f32 %v853, 0.25
    %v866 = vmul.f32 %v854, 0.25
    %v867 = vmul.f32 %v855, 0.25
    %v868 = vadd.f32 %v832, %v856
    %v869 = vadd.f32 %v833, %v857
    %v870 = vadd.f32 %v834, %v858
    %v871 = vadd.f32 %v835, %v859
    %v872 = vadd.f32 %v836, %v860
    %v873 = vadd.f32 %v837, %v861
    %v874 = vadd.f32 %v838, %v862
    %v875 = vadd.f32 %v839, %v863
    %v876 = vadd.f32 %v840, %v864
    %v877 = vadd.f32 %v841, %v865
    %v878 = vadd.f32 %v842, %v866
    %v879 = vadd.f32 %v843, %v867
    %vm880 = vcmask 64513
    %881 = vst.msk [vmem:[#allocation2 - $0x1] sm:$0xfe] %vm880, %v868
    %vm882 = vcmask 57344
    %883 = vst.msk [vmem:[#allocation2 + $0x7] sm:$0x1] %vm882, %v869
    %884 = vst.msk [vmem:[#allocation2 + $0x7] sm:$0xfe] %vm880, %v870
    %885 = vst.msk [vmem:[#allocation2 + $0xf] sm:$0x1] %vm882, %v871
    %886 = vst.msk [vmem:[#allocation2 + $0xf] sm:$0xfe] %vm880, %v872
    %887 = vst.msk [vmem:[#allocation2 + $0x17] sm:$0x1] %vm882, %v873
    %888 = vst.msk [vmem:[#allocation2 + $0x17] sm:$0xfe] %vm880, %v874
    %889 = vst.msk [vmem:[#allocation2 + $0x1f] sm:$0x1] %vm882, %v875
    %890 = vst.msk [vmem:[#allocation2 + $0x1f] sm:$0xfe] %vm880, %v876
    %891 = vst.msk [vmem:[#allocation2 + $0x27] sm:$0x1] %vm882, %v877
    %892 = vst.msk [vmem:[#allocation2 + $0x27] sm:$0xfe] %vm880, %v878
    %893 = vst.msk [vmem:[#allocation2 + $0x2f] sm:$0x1] %vm882, %v879
    %v894 = vmul.f32 %v442, 0.375
    %v895 = vmul.f32 %v443, 0.375
    %v896 = vadd.f32 %v440, %v730
    %v897 = vadd.f32 %v441, %v731
    %v898 = vmul.f32 %v896, 0.0625
    %v899 = vmul.f32 %v897, 0.0625
    %v900 = vadd.f32 %v894, %v898
    %v901 = vadd.f32 %v895, %v899
    %v902 = vadd.f32 %v696, %v698
    %v903 = vadd.f32 %v697, %v699
    %v904 = vmul.f32 %v902, 0.25
    %v905 = vmul.f32 %v903, 0.25
    %v906 = vadd.f32 %v900, %v904
    %v907 = vadd.f32 %v901, %v905
    %v908 = vmul.f32 %v730, 0.375
    %v909 = vmul.f32 %v731, 0.375
    %v910 = vadd.f32 %v442, %v762
    %v911 = vadd.f32 %v443, %v763
    %v912 = vmul.f32 %v910, 0.0625
    %v913 = vmul.f32 %v911, 0.0625
    %v914 = vadd.f32 %v908, %v912
    %v915 = vadd.f32 %v909, %v913
    %v916 = vadd.f32 %v698, %v794
    %v917 = vadd.f32 %v699, %v795
    %v918 = vmul.f32 %v916, 0.25
    %v919 = vmul.f32 %v917, 0.25
    %v920 = vadd.f32 %v914, %v918
    %v921 = vadd.f32 %v915, %v919
    %s922 = scalar_lea.vmem [#allocation2], 48
    %923 = vst.msk [vmem:[%s922 - $0x1] sm:$0xfe] %vm880, %v906
    %924 = vst.msk [vmem:[%s922 + $0x7] sm:$0x1] %vm882, %v907
    %s925 = scalar_lea.vmem [#allocation2], 56
    %926 = vst.msk [vmem:[%s925 - $0x1] sm:$0xfe] %vm880, %v920
    %927 = vst.msk [vmem:[%s925 + $0x7] sm:$0x1] %vm882, %v921
    // Predicated region
    $region42: #{tpu_custom_call.1} parent=1 // pred_check
      _
    $region43: #{tpu_custom_call.1} parent=1 // pred_check_branch
      %929 = sbr.rel (0) target = $region45
    $region44: #{tpu_custom_call.1} parent=1 // pred_region
      %s931 = ssub.s32 1024, 1024
      %932 = vsyncadd [#allocation3], %s931
      %s933 = sshll.u32 [#allocation2], 4
      %s934 = int_to_ptr.vmem [resolvable:$true] %s933
      %939 = dma.vmem_to_hbm [thread:$0]  %s934, 1024, %s10, [#allocation3], 128, 128, 8
    $region45: #{tpu_custom_call.1} parent=1 // pred_fallthru
      _
    // Predicated region
    $region46: #{tpu_custom_call.1} parent=1 // pred_check
      _
    $region47: #{tpu_custom_call.1} parent=1 // pred_check_branch
      %941 = sbr.rel (0) target = $region49
    $region48: #{tpu_custom_call.1} parent=1 // pred_region
      %942 = dma.done [#allocation3], 1024
    $region49: #{tpu_custom_call.1} parent=1 // pred_fallthru
      _
    %943 = vsyncpa [#allocation3], 1

</llo_original>
